<compile_context>
chip_gen: v6e
topology: v6e:2x2x1
jax: 0.10.0
libtpu: 0.0.40
codegen_flags: <defaults>
</compile_context>

<pallas_src>
import jax
import jax.numpy as jnp
from jax.experimental import pallas as pl
from jax.experimental.pallas import tpu as pltpu

# Synthetic ENCODING_CONSTANTS (small, deterministic — not a checkpoint load).
MOVE_DIM = 16           # ENCODING_CONSTANTS.MOVE
EMBEDDED_MOVE_DIM = 32  # ENCODING_CONSTANTS.EMBEDDED_MOVE

PACK = 8                               # moves folded per packed row -> 8*16 = 128 lanes
PACKED_IN = PACK * MOVE_DIM            # 128
PACKED_OUT = PACK * EMBEDDED_MOVE_DIM  # 256


def _round_up(x: int, m: int) -> int:
    return ((x + m - 1) // m) * m


# ----------------------------- kernel ---------------------------------------


def _packed_linear_kernel(x_ref, w_ref, b_ref, o_ref):
    # x_ref: (mt, 128)   w_ref: (128, 256) block-diag kron(I_8, W^T)
    # b_ref: (1, 256)    o_ref: (mt, 256)
    y = jnp.dot(x_ref[...], w_ref[...], preferred_element_type=jnp.float32)  # MXU
    o_ref[...] = (y + b_ref[...]).astype(o_ref.dtype)


# ----------------------------- params ---------------------------------------


def prepare_move_embedder_params(weight, bias):
    """Pack weights ONCE (at init / param load), not per forward call."""
    assert weight.shape == (EMBEDDED_MOVE_DIM, MOVE_DIM)
    assert bias.shape == (EMBEDDED_MOVE_DIM,)
    w_packed = jnp.kron(jnp.eye(PACK, dtype=weight.dtype), weight.T)   # (128, 256)
    bias_packed = jnp.tile(bias, PACK).reshape(1, PACKED_OUT)          # (1, 256)
    return {
        "weight": weight,
        "bias": bias,
        "w_packed": w_packed,
        "bias_packed": bias_packed,
    }


def init_move_embedder_params(key, dtype=jnp.float32):
    k_w, k_b = jax.random.split(key)
    weight = jax.random.normal(k_w, (EMBEDDED_MOVE_DIM, MOVE_DIM), dtype=dtype) * 0.1
    bias = jax.random.normal(k_b, (EMBEDDED_MOVE_DIM,), dtype=dtype) * 0.1
    return prepare_move_embedder_params(weight, bias)


# ----------------------------- forward --------------------------------------


def move_embedder_forward(moves, params, *, m_tile=4096, min_pallas_rows=4096,
                          force_pallas=False):
    """moves: (b, n, MOVE_DIM) f32 -> (b, n, EMBEDDED_MOVE_DIM).

    Computes y = x @ W^T + b (PyTorch nn.Linear semantics).
    """
    b, n, d = moves.shape
    assert d == MOVE_DIM
    weight, bias = params["weight"], params["bias"]
    out_dim = weight.shape[0]
    M = b * n
    x = moves.reshape(M, d)

    # Small-M fast path: a standalone pallas_call is dominated by dispatch
    # overhead below a few thousand rows; plain XLA is faster and fusable.
    if not force_pallas and M < min_pallas_rows:
        return (x @ weight.T + bias).reshape(b, n, out_dim)

    w_packed = params["w_packed"]
    bias_packed = params["bias_packed"]

    # Pad only to a whole number of packed rows (multiple of PACK=8 moves).
    mp = pl.cdiv(M, PACK)                 # packed rows
    pad_rows = mp * PACK - M
    if pad_rows:
        x = jnp.pad(x, ((0, pad_rows), (0, 0)))
    x_packed = x.reshape(mp, PACKED_IN)   # row-major: 8 consecutive moves per packed row

    # Tile in packed rows (8-sublane aligned).  Ragged last block handled by
    # Pallas; OOB output rows are never written back.
    mt = min(m_tile, _round_up(mp, 8))
    num_steps = pl.cdiv(mp, mt)
    if num_steps == 1 and mp > 8:
        # Ensure >= 2 grid steps so both TensorCores get work on v7x and the
        # in/out DMA pipeline stays double-buffered.
        mt = _round_up(pl.cdiv(mp, 2), 8)
        num_steps = pl.cdiv(mp, mt)

    y_packed = pl.pallas_call(
        _packed_linear_kernel,
        out_shape=jax.ShapeDtypeStruct((mp, PACKED_OUT), moves.dtype),
        grid=(num_steps,),
        in_specs=[
            pl.BlockSpec((mt, PACKED_IN), lambda i: (i, 0)),          # x tile: pipelined
            pl.BlockSpec((PACKED_IN, PACKED_OUT), lambda i: (0, 0)),  # packed weight: resident
            pl.BlockSpec((1, PACKED_OUT), lambda i: (0, 0)),          # packed bias: resident
        ],
        out_specs=pl.BlockSpec((mt, PACKED_OUT), lambda i: (i, 0)),
        compiler_params=pltpu.CompilerParams(
            dimension_semantics=("parallel",),   # shards grid across 2 TCs on v7x
            vmem_limit_bytes=32 << 20,           # raise v5e's 16 MiB default; safe everywhere
        ),
    )(x_packed, w_packed, bias_packed)

    # Unpack: (mp, 256) -> (mp*8, 32); drop the (at most 7) padded rows.
    y = y_packed.reshape(mp * PACK, out_dim)
    if pad_rows:
        y = y[:M]
    return y.reshape(b, n, out_dim)


def reference_forward(moves, weight, bias):
    b, n, d = moves.shape
    h = moves.reshape(b * n, d)
    h = h @ weight.T + bias
    return h.reshape(b, n, -1)


if __name__ == "__main__":
    key = jax.random.PRNGKey(0)
    k_moves, k_params = jax.random.split(key)

    params = init_move_embedder_params(k_params)

    # Small shipped shape: batch=2, N_moves=8, feat=16 -> M=16.
    batch, n_moves = 2, 8
    moves = jax.random.normal(k_moves, (batch, n_moves, MOVE_DIM), dtype=jnp.float32)
    ref = reference_forward(moves, params["weight"], params["bias"])

    # Exercise the Pallas kernel path explicitly at the small shape...
    out_pallas = jax.block_until_ready(
        move_embedder_forward(moves, params, force_pallas=True))
    assert out_pallas.shape == (batch, n_moves, EMBEDDED_MOVE_DIM)
    assert jnp.allclose(out_pallas, ref, atol=1e-5, rtol=1e-5)

    # ... and the default dispatch (small-M XLA fast path).
    out_default = jax.block_until_ready(move_embedder_forward(moves, params))
    assert jnp.allclose(out_default, ref, atol=1e-5, rtol=1e-5)

    # Larger M exercises the multi-step "parallel" grid (Pallas path by default).
    moves_big = jax.random.normal(key, (64, 300, MOVE_DIM), dtype=jnp.float32)  # M=19200
    out_big = jax.block_until_ready(move_embedder_forward(moves_big, params))
    ref_big = reference_forward(moves_big, params["weight"], params["bias"])
    assert jnp.allclose(out_big, ref_big, atol=1e-4, rtol=1e-4)

    # Ragged M (not a multiple of 8) exercises the minimal-pad + slice path.
    moves_rag = jax.random.normal(k_moves, (3, 7, MOVE_DIM), dtype=jnp.float32)  # M=21
    out_rag = jax.block_until_ready(
        move_embedder_forward(moves_rag, params, force_pallas=True))
    ref_rag = reference_forward(moves_rag, params["weight"], params["bias"])
    assert jnp.allclose(out_rag, ref_rag, atol=1e-5, rtol=1e-5)

    print("KERNEL_OK")
</pallas_src>

<mosaic_0001>
module attributes {stable_mosaic.version = 11 : i64} {
  func.func @_packed_linear_kernel(%arg0: i32, %arg1: memref<8x128xf32, #tpu.memory_space<vmem>>, %arg2: memref<128x256xf32, #tpu.memory_space<vmem>>, %arg3: memref<1x256xf32, #tpu.memory_space<vmem>>, %arg4: memref<8x256xf32, #tpu.memory_space<vmem>>) attributes {dimension_semantics = [#tpu.dimension_semantics<parallel>], iteration_bounds = array<i64: 1>, scalar_prefetch = 0 : i64, scratch_operands = 0 : i64, tpu.core_type = #tpu.core_type<tc>, window_params = [{transform_indices = @transform_0, window_bounds = array<i64: 8, 128>}, {pipeline_mode = #tpu.pipeline_mode<synchronous>, transform_indices = @transform_1, window_bounds = array<i64: 128, 256>}, {pipeline_mode = #tpu.pipeline_mode<synchronous>, transform_indices = @transform_2, window_bounds = array<i64: 1, 256>}, {transform_indices = @transform_3, window_bounds = array<i64: 8, 256>}]} {
    %c0 = arith.constant 0 : index
    %c0_0 = arith.constant 0 : index
    %0 = vector.load %arg1[%c0, %c0_0] : memref<8x128xf32, #tpu.memory_space<vmem>>, vector<8x128xf32>
    %c0_1 = arith.constant 0 : index
    %c0_2 = arith.constant 0 : index
    %1 = vector.load %arg2[%c0_1, %c0_2] : memref<128x256xf32, #tpu.memory_space<vmem>>, vector<128x256xf32>
    %cst = arith.constant dense<0.000000e+00> : vector<8x256xf32>
    %2 = tpu.matmul %0, %1, %cst {dimension_numbers = #tpu.dot_dimension_numbers<[1], [0], [0], [1], [0, 0, 1, 1], [], []>} : vector<8x128xf32>, vector<128x256xf32>, vector<8x256xf32> -> vector<8x256xf32>
    %c0_3 = arith.constant 0 : index
    %c0_4 = arith.constant 0 : index
    %3 = vector.load %arg3[%c0_3, %c0_4] : memref<1x256xf32, #tpu.memory_space<vmem>>, vector<1x256xf32>
    %4 = vector.broadcast %3 : vector<1x256xf32> to vector<8x256xf32>
    %5 = arith.addf %2, %4 : vector<8x256xf32>
    %c0_5 = arith.constant 0 : index
    %c0_6 = arith.constant 0 : index
    %6 = vector.load %arg4[%c0_5, %c0_6] : memref<8x256xf32, #tpu.memory_space<vmem>>, vector<8x256xf32>
    tpu.vector_store %arg4[%c0_5, %c0_6], %5 {strides = array<i32>} : memref<8x256xf32, #tpu.memory_space<vmem>>, vector<8x256xf32>,
    return
  }
  func.func @transform_0(%arg0: i32) -> (i32, i32) {
    %c0_i32 = arith.constant 0 : i32
    %c0_i32_0 = arith.constant 0 : i32
    return %arg0, %c0_i32 : i32, i32
  }
  func.func @transform_1(%arg0: i32) -> (i32, i32) {
    %c0_i32 = arith.constant 0 : i32
    %c0_i32_0 = arith.constant 0 : i32
    %c0_i32_1 = arith.constant 0 : i32
    return %c0_i32, %c0_i32_0 : i32, i32
  }
  func.func @transform_2(%arg0: i32) -> (i32, i32) {
    %c0_i32 = arith.constant 0 : i32
    %c0_i32_0 = arith.constant 0 : i32
    %c0_i32_1 = arith.constant 0 : i32
    return %c0_i32, %c0_i32_0 : i32, i32
  }
  func.func @transform_3(%arg0: i32) -> (i32, i32) {
    %c0_i32 = arith.constant 0 : i32
    %c0_i32_0 = arith.constant 0 : i32
    return %arg0, %c0_i32 : i32, i32
  }
}

</mosaic_0001>

<llo_original>
// kernel: tpu_custom_call.1
$region0: #{tpu_custom_call.1}
  #allocation0 [shape = 'u32[]', space=smem, size = 0x4, offset = 0x4, fixed_abs, tag = 'smem constant byte address 0x4 - core index']
  #allocation1 [shape = 'u32[144,128]{1,0:T(1,128)}', space=vmem, size = 0x12000, scoped, tag = 'internal scratch']
  %s0 = inlined_call_operand.hbm [shape: f32[2,128], index: 0, kind: input, shape index: {}]
  %s1 = inlined_call_operand.hbm [shape: f32[128,256], index: 1, kind: input, shape index: {}]
  %s2 = inlined_call_operand.vmem [shape: f32[1,256], index: 2, kind: input, shape index: {}]
  %s3 = inlined_call_operand.hbm [shape: f32[2,256], index: 3, kind: output, shape index: {}]
  %s4 = sld [smem:[#allocation0]]
  $region30: #{tpu_custom_call.1} parent=0
    _
  %s6 = ssub.s32 1, %s4
  %s7 = scalar_select 0, %s6, %s4
  $region1: #{tpu_custom_call.1} parent=0
    #allocation2 [shape = 'u8[4096]{0}', space=vmem, size = 0x1000, scoped, tag = 'input window, operand 0, single buffered']
    #allocation3 [shape = 's32[1]{0}', space=sflag, size = 0x4, scoped, tag = 'scoped memory for tpu_custom_call.1']
    #allocation4 [shape = 's32[1]{0}', space=sflag, size = 0x4, scoped, tag = 'scoped memory for tpu_custom_call.1']
    #allocation5 [shape = 'u8[131072]{0}', space=vmem, size = 0x20000, scoped, tag = 'input window, operand 1, single buffered']
    #allocation6 [shape = 's32[1]{0}', space=sflag, size = 0x4, scoped, tag = 'scoped memory for tpu_custom_call.1']
    #allocation7 [shape = 'u8[8192]{0}', space=vmem, size = 0x2000, scoped, tag = 'output window, operand 0, single buffered']
    %8 = vsyncpa [#allocation3], 0
    %9 = vsyncpa [#allocation6], 0
    %10 = vsyncpa [#allocation4], 0
    // Predicated region
    $region2: #{tpu_custom_call.1} parent=1 // pred_check
      _
    $region3: #{tpu_custom_call.1} parent=1 // pred_check_branch
      %12 = sbr.rel (0) target = $region5
    $region4: #{tpu_custom_call.1} parent=1 // pred_region
      %s14 = ssub.s32 128, 32
      %15 = vsyncadd [#allocation3], %s14
      %s16 = sshll.u32 [#allocation2], 4
      %s17 = int_to_ptr.vmem [resolvable:$true] %s16
      %22 = dma.hbm_to_vmem [thread:$0]  %s0, 32, %s17, [#allocation3], 32, 32, 2
    $region5: #{tpu_custom_call.1} parent=1 // pred_fallthru
      _
    // Predicated region
    $region6: #{tpu_custom_call.1} parent=1 // pred_check
      _
    $region7: #{tpu_custom_call.1} parent=1 // pred_check_branch
      %24 = sbr.rel (0) target = $region9
    $region8: #{tpu_custom_call.1} parent=1 // pred_region
      %s26 = ssub.s32 4096, 4096
      %27 = vsyncadd [#allocation6], %s26
      %s28 = sshll.u32 [#allocation5], 4
      %s29 = int_to_ptr.vmem [resolvable:$true] %s28
      %34 = dma.hbm_to_vmem [thread:$0]  %s1, 4096, %s29, [#allocation6], 256, 256, 16
    $region9: #{tpu_custom_call.1} parent=1 // pred_fallthru
      _
    // Predicated region
    $region10: #{tpu_custom_call.1} parent=1 // pred_check
      _
    $region11: #{tpu_custom_call.1} parent=1 // pred_check_branch
      %36 = sbr.rel (0) target = $region13
    $region12: #{tpu_custom_call.1} parent=1 // pred_region
      _
    $region13: #{tpu_custom_call.1} parent=1 // pred_fallthru
      _
    // Predicated region
    $region14: #{tpu_custom_call.1} parent=1 // pred_check
      _
    $region15: #{tpu_custom_call.1} parent=1 // pred_check_branch
      %38 = sbr.rel (0) target = $region17
    $region16: #{tpu_custom_call.1} parent=1 // pred_region
      %39 = dma.done [#allocation3], 128
    $region17: #{tpu_custom_call.1} parent=1 // pred_fallthru
      _
    // Predicated region
    $region18: #{tpu_custom_call.1} parent=1 // pred_check
      _
    $region19: #{tpu_custom_call.1} parent=1 // pred_check_branch
      %41 = sbr.rel (0) target = $region21
    $region20: #{tpu_custom_call.1} parent=1 // pred_region
      %42 = dma.done [#allocation6], 4096
    $region21: #{tpu_custom_call.1} parent=1 // pred_fallthru
      _
    %v43 = vld [vmem:[#allocation2] sm:$0xff]
    %v44 = vld [vmem:[#allocation5] sm:$0xff]
    %v45 = vld [vmem:[#allocation5 + $0x8] sm:$0xff]
    %v46 = vld [vmem:[#allocation5 + $0x10] sm:$0xff]
    %v47 = vld [vmem:[#allocation5 + $0x18] sm:$0xff]
    %v48 = vld [vmem:[#allocation5 + $0x20] sm:$0xff]
    %v49 = vld [vmem:[#allocation5 + $0x28] sm:$0xff]
    %v50 = vld [vmem:[#allocation5 + $0x30] sm:$0xff]
    %v51 = vld [vmem:[#allocation5 + $0x38] sm:$0xff]
    %v52 = vld [vmem:[#allocation5 + $0x40] sm:$0xff]
    %v53 = vld [vmem:[#allocation5 + $0x48] sm:$0xff]
    %v54 = vld [vmem:[#allocation5 + $0x50] sm:$0xff]
    %v55 = vld [vmem:[#allocation5 + $0x58] sm:$0xff]
    %v56 = vld [vmem:[#allocation5 + $0x60] sm:$0xff]
    %v57 = vld [vmem:[#allocation5 + $0x68] sm:$0xff]
    %v58 = vld [vmem:[#allocation5 + $0x70] sm:$0xff]
    %v59 = vld [vmem:[#allocation5 + $0x78] sm:$0xff]
    %v60 = vld [vmem:[#allocation5 + $0x80] sm:$0xff]
    %v61 = vld [vmem:[#allocation5 + $0x88] sm:$0xff]
    %v62 = vld [vmem:[#allocation5 + $0x90] sm:$0xff]
    %v63 = vld [vmem:[#allocation5 + $0x98] sm:$0xff]
    %v64 = vld [vmem:[#allocation5 + $0xa0] sm:$0xff]
    %v65 = vld [vmem:[#allocation5 + $0xa8] sm:$0xff]
    %v66 = vld [vmem:[#allocation5 + $0xb0] sm:$0xff]
    %v67 = vld [vmem:[#allocation5 + $0xb8] sm:$0xff]
    %v68 = vld [vmem:[#allocation5 + $0xc0] sm:$0xff]
    %v69 = vld [vmem:[#allocation5 + $0xc8] sm:$0xff]
    %v70 = vld [vmem:[#allocation5 + $0xd0] sm:$0xff]
    %v71 = vld [vmem:[#allocation5 + $0xd8] sm:$0xff]
    %v72 = vld [vmem:[#allocation5 + $0xe0] sm:$0xff]
    %v73 = vld [vmem:[#allocation5 + $0xe8] sm:$0xff]
    %v74 = vld [vmem:[#allocation5 + $0xf0] sm:$0xff]
    %v75 = vld [vmem:[#allocation5 + $0xf8] sm:$0xff]
    %v76 = vld [vmem:[%s2] sm:$0x3]
    %v78 = vlaneseq
    %v79 = vshrl.u32 %v78, 7
    %v80 = vsub.s32 0, %v79
    %v81 = vrot.slane %v76, %v80
    %v82 = vlaneseq
    %v83 = vshrl.u32 %v82, 7
    %v84 = vsub.s32 1, %v83
    %v85 = vrot.slane %v76, %v84
    %88 = vmatprep.subr.mxu0 %v75
    %89 = vmatpush1.msra.mxu0 %v74
    %90 = vmatprep.subr.mxu0 %v73
    %91 = vmatpush1.msra.mxu0 %v72
    %92 = vmatprep.subr.mxu0 %v71
    %93 = vmatpush1.msra.mxu0 %v70
    %94 = vmatprep.subr.mxu0 %v69
    %95 = vmatpush1.msra.mxu0 %v68
    %96 = vmatprep.subr.mxu0 %v67
    %97 = vmatpush1.msra.mxu0 %v66
    %98 = vmatprep.subr.mxu0 %v65
    %99 = vmatpush1.msra.mxu0 %v64
    %100 = vmatprep.subr.mxu0 %v63
    %101 = vmatpush1.msra.mxu0 %v62
    %102 = vmatprep.subr.mxu0 %v61
    %103 = vmatpush1.msra.mxu0 %v60
    %104 = vmatprep.subr.mxu0 %v59
    %105 = vmatpush1.msra.mxu0 %v58
    %106 = vmatprep.subr.mxu0 %v57
    %107 = vmatpush1.msra.mxu0 %v56
    %108 = vmatprep.subr.mxu0 %v55
    %109 = vmatpush1.msra.mxu0 %v54
    %110 = vmatprep.subr.mxu0 %v53
    %111 = vmatpush1.msra.mxu0 %v52
    %112 = vmatprep.subr.mxu0 %v51
    %113 = vmatpush1.msra.mxu0 %v50
    %114 = vmatprep.subr.mxu0 %v49
    %115 = vmatpush1.msra.mxu0 %v48
    %116 = vmatprep.subr.mxu0 %v47
    %117 = vmatpush1.msra.mxu0 %v46
    %118 = vmatprep.subr.mxu0 %v45
    %119 = vmatpush1.msra.mxu0 %v44
    %120 = vmatprep.subr.mxu0 0.0
    %121 = vmatpush2.msra.mxu0 0.0
    %122 = vmatprep.subr.mxu0 0.0
    %123 = vmatpush2.msra.mxu0 0.0
    %124 = vmatprep.subr.mxu0 0.0
    %125 = vmatpush2.msra.mxu0 0.0
    %126 = vmatprep.subr.mxu0 0.0
    %127 = vmatpush2.msra.mxu0 0.0
    %128 = vmatprep.subr.mxu0 0.0
    %129 = vmatpush2.msra.mxu0 0.0
    %130 = vmatprep.subr.mxu0 0.0
    %131 = vmatpush2.msra.mxu0 0.0
    %132 = vmatprep.subr.mxu0 0.0
    %133 = vmatpush2.msra.mxu0 0.0
    %134 = vmatprep.subr.mxu0 0.0
    %135 = vmatpush2.msra.mxu0 0.0
    %136 = vmatprep.subr.mxu0 0.0
    %137 = vmatpush2.msra.mxu0 0.0
    %138 = vmatprep.subr.mxu0 0.0
    %139 = vmatpush2.msra.mxu0 0.0
    %140 = vmatprep.subr.mxu0 0.0
    %141 = vmatpush2.msra.mxu0 0.0
    %142 = vmatprep.subr.mxu0 0.0
    %143 = vmatpush2.msra.mxu0 0.0
    %144 = vmatprep.subr.mxu0 0.0
    %145 = vmatpush2.msra.mxu0 0.0
    %146 = vmatprep.subr.mxu0 0.0
    %147 = vmatpush2.msra.mxu0 0.0
    %148 = vmatprep.subr.mxu0 0.0
    %149 = vmatpush2.msra.mxu0 0.0
    %150 = vmatprep.subr.mxu0 0.0
    %151 = vmatpush2.msra.mxu0 0.0
    %152 = vmatprep.mubr.f32.mxu0 0.0
    %153 = vmatmul.mubr.f32.gmra.mxu0 %v43
    %v154 = vpop.f32.mrf.mxu0
    %v155 = vadd.f32 %v81, %v154
    %v156 = vpop.f32.mrf.mxu0
    %v157 = vadd.f32 %v85, %v156
    %158 = vdwg.mxu0
    %v161 = vcombine.low %v155, %v157
    %v162 = vcombine.high %v155, %v157
    %v164 = vunpack.c.l.s4 1983009808
    %v165 = vunpack.c.0.s8 %v164
    %v166 = vlaneseq
    %v167 = vshrl.u32 %v166, 7
    %v168 = vsub.s32 %v165, %v167
    %v169 = vrot.slane %v161, %v168
    %v171 = vunpack.c.l.s4 1983009808
    %v172 = vunpack.c.0.s8 %v171
    %v173 = vlaneseq
    %v174 = vshrl.u32 %v173, 7
    %v175 = vsub.s32 %v172, %v174
    %v176 = vrot.slane %v162, %v175
    %v177 = vcombine.high %v169, %v169
    %v178 = vcombine.high %v176, %v176
    %183 = vst [vmem:[#allocation7] sm:$0xf] %v169
    %184 = vst [vmem:[#allocation7 + $0x4] sm:$0xf] %v177
    %185 = vst [vmem:[#allocation7 + $0x8] sm:$0xf] %v176
    %186 = vst [vmem:[#allocation7 + $0xc] sm:$0xf] %v178
    // Predicated region
    $region22: #{tpu_custom_call.1} parent=1 // pred_check
      _
    $region23: #{tpu_custom_call.1} parent=1 // pred_check_branch
      %188 = sbr.rel (0) target = $region25
    $region24: #{tpu_custom_call.1} parent=1 // pred_region
      %s190 = ssub.s32 256, 64
      %191 = vsyncadd [#allocation4], %s190
      %s192 = sshll.u32 [#allocation7], 4
      %s193 = int_to_ptr.vmem [resolvable:$true] %s192
      %198 = dma.vmem_to_hbm [thread:$0]  %s193, 64, %s3, [#allocation4], 64, 64, 4
    $region25: #{tpu_custom_call.1} parent=1 // pred_fallthru
      _
    // Predicated region
    $region26: #{tpu_custom_call.1} parent=1 // pred_check
      _
    $region27: #{tpu_custom_call.1} parent=1 // pred_check_branch
      %200 = sbr.rel (0) target = $region29
    $region28: #{tpu_custom_call.1} parent=1 // pred_region
      %201 = dma.done [#allocation4], 256
    $region29: #{tpu_custom_call.1} parent=1 // pred_fallthru
      _
    %202 = vsyncpa [#allocation3], 1
    %203 = vsyncpa [#allocation6], 1
    %204 = vsyncpa [#allocation4], 1

</llo_original>
